<compile_context>
chip_gen: v5e
topology: v5e:2x2
jax: 0.10.0
libtpu: 0.0.40
codegen_flags: <defaults>
</compile_context>

<pallas_src>
import functools

import jax
import jax.numpy as jnp
from jax import lax
from jax.experimental import pallas as pl
from jax.experimental.pallas import tpu as pltpu


def _round_up(x, m):
    return (x + m - 1) // m * m


# ----------------------------------------------------------------------------
# Pallas kernel: K-gridded matmul with f32 VMEM accumulator (+ fused ReLU)
# ----------------------------------------------------------------------------
def _matmul_relu_kernel(x_ref, w_ref, o_ref, acc_ref, *, apply_relu: bool):
    k = pl.program_id(2)

    @pl.when(k == 0)
    def _():
        acc_ref[...] = jnp.zeros_like(acc_ref)

    acc_ref[...] += jnp.dot(x_ref[...], w_ref[...],
                            preferred_element_type=jnp.float32)

    @pl.when(k == pl.num_programs(2) - 1)
    def _():
        acc = acc_ref[...]
        if apply_relu:
            acc = jnp.maximum(acc, 0.0)
        o_ref[...] = acc.astype(o_ref.dtype)


def _pick_tm(m, tm_max=512):
    if m > tm_max:
        return tm_max                       # ragged tail masked by Pallas
    if m >= 16:
        # Split into >= 2 M tiles so a v7x chip can use both TensorCores.
        return _round_up(pl.cdiv(m, 2), 8)
    return m                                # block dim == full array dim (ok)


def _pick_tk(k, tk_max=1024):
    if k <= tk_max:
        return k
    for cand in (1024, 512, 256, 128):
        if k % cand == 0:
            return cand
    # TODO(synk): huge K that is not a multiple of 128 would need zero-padded
    # K tiles; conv K = KH*KW*IC is a multiple of 128 for realistic configs.
    return k


def pallas_matmul(x, w, *, apply_relu: bool, out_dtype=jnp.float32):
    """x: (M, K) bf16, w: (K, Np) bf16 with Np % 128 == 0 -> (M, Np) out_dtype.

    Grid = (N tiles, M tiles, K tiles); N outermost (weight-resident when it
    collapses to 1), K innermost "arbitrary" reduction into a VMEM f32
    accumulator.  No padding of the (large) x matrix is ever materialized.
    """
    M, K = x.shape
    K2, Np = w.shape
    assert K == K2
    assert Np % 128 == 0

    tm = _pick_tm(M)
    tn = Np if Np <= 512 else (256 if Np % 256 == 0 else 128)
    tk = _pick_tk(K)

    grid_n = Np // tn
    grid_m = pl.cdiv(M, tm)
    grid_k = K // tk if K % tk == 0 else 1
    if grid_k == 1:
        tk = K
    grid = (grid_n, grid_m, grid_k)         # (j, i, k): N outer, K innermost

    # Advisory cost estimate, consistent with the actual fetch pattern: x is
    # re-read per N tile; weights are fetched once when their block index is
    # constant, otherwise once per (M tile, N tile).
    w_fetches = 1 if (grid_k == 1 and grid_n == 1) else grid_m * grid_n
    flops = 2 * M * K * Np
    bytes_accessed = (grid_n * M * K * 2 + w_fetches * K * Np * 2
                      + M * Np * jnp.dtype(out_dtype).itemsize)

    return pl.pallas_call(
        functools.partial(_matmul_relu_kernel, apply_relu=apply_relu),
        out_shape=jax.ShapeDtypeStruct((M, Np), out_dtype),
        grid=grid,
        in_specs=[
            pl.BlockSpec((tm, tk), lambda j, i, k: (i, k)),
            pl.BlockSpec((tk, tn), lambda j, i, k: (k, j)),
        ],
        out_specs=pl.BlockSpec((tm, tn), lambda j, i, k: (i, j)),
        scratch_shapes=[pltpu.VMEM((tm, tn), jnp.float32)],
        compiler_params=pltpu.CompilerParams(
            dimension_semantics=("parallel", "parallel", "arbitrary")),
        cost_estimate=pl.CostEstimate(
            flops=flops, transcendentals=0, bytes_accessed=bytes_accessed),
    )(x, w)


# ----------------------------------------------------------------------------
# im2col from NHWC (pure XLA indexing glue; no stacks, no transposes)
# ----------------------------------------------------------------------------
def _im2col_nhwc(x, ic, kh, kw, stride, pad):
    """x: (N, H, W, C>=ic) bf16 -> patches (N*OH*OW, KH*KW*ic), plus (OH, OW).

    Feature order is (kh, kw, ic), matching prepare_weight_mats().  The slice
    end indices below rely on Python slice clamping to the padded extent; they
    always select exactly OH (resp. OW) rows, so they stay in bounds.
    """
    n, h, w = x.shape[0], x.shape[1], x.shape[2]
    if pad:
        x = jnp.pad(x, ((0, 0), (pad, pad), (pad, pad), (0, 0)))
    hp, wp = h + 2 * pad, w + 2 * pad
    oh = (hp - kh) // stride + 1
    ow = (wp - kw) // stride + 1
    cols = [
        x[:, i:i + stride * oh:stride, j:j + stride * ow:stride, :ic]
        for i in range(kh) for j in range(kw)
    ]
    patches = jnp.concatenate(cols, axis=-1)           # (N, OH, OW, KH*KW*ic)
    return patches.reshape(n * oh * ow, kh * kw * ic), oh, ow


def conv2d_pallas(x_nhwc, w_mat, ic, kh, kw, stride, pad, *, apply_relu, out_dtype):
    """Bias-free conv: x_nhwc (N,H,W,C>=ic) bf16, w_mat (KH*KW*ic, OCp) bf16."""
    n = x_nhwc.shape[0]
    patches, oh, ow = _im2col_nhwc(x_nhwc, ic, kh, kw, stride, pad)
    out = pallas_matmul(patches, w_mat, apply_relu=apply_relu, out_dtype=out_dtype)
    return out.reshape(n, oh, ow, -1)                  # (N, OH, OW, OC_pad)


# ----------------------------------------------------------------------------
# Critic forward
# ----------------------------------------------------------------------------
def critic_forward(x_nchw, w_mats, cf, ck, cs, cp):
    num_layers = len(w_mats)
    x = jnp.transpose(x_nchw, (0, 2, 3, 1))            # NCHW -> NHWC, once
    x = x.astype(jnp.bfloat16)                         # cast BEFORE im2col
    for lay in range(num_layers):
        last = lay == num_layers - 1
        x = conv2d_pallas(
            x, w_mats[lay], cf[lay], ck[lay], ck[lay], cs[lay], cp[lay],
            apply_relu=not last,
            out_dtype=jnp.float32 if last else jnp.bfloat16,
        )
    out = x[..., :cf[-1]]                              # drop lane padding
    return jnp.transpose(out, (0, 3, 1, 2))            # NHWC -> NCHW, once


def init_critic_weights(key, cf, ck):
    """Deterministic init: N(0, 0.02) per conv weight, PyTorch (OC, IC, KH, KW)."""
    weights = []
    for lay, k in enumerate(ck):
        key, sub = jax.random.split(key)
        w = 0.02 * jax.random.normal(
            sub, (cf[lay + 1], cf[lay], k, k), dtype=jnp.float32)
        weights.append(w)
    return weights


def prepare_weight_mats(weights):
    """Hoisted once: (OC, IC, KH, KW) -> bf16 (KH*KW*IC, round_up(OC, 128))."""
    mats = []
    for w in weights:
        oc, ic, kh, kw = w.shape
        ocp = max(128, _round_up(oc, 128))
        m = jnp.transpose(w, (2, 3, 1, 0)).reshape(kh * kw * ic, oc)
        m = jnp.pad(m, ((0, 0), (0, ocp - oc)))
        mats.append(m.astype(jnp.bfloat16))
    return mats


if __name__ == "__main__":
    # Small DCGAN-critic-like configuration: 16x16 -> 8x8 -> 4x4 -> 1x1.
    cf = [4, 8, 16, 1]      # channels per stage (len = num_layers + 1)
    ck = [4, 4, 4]          # kernel sizes
    cs = [2, 2, 1]          # strides
    cp = [1, 1, 0]          # paddings

    key = jax.random.PRNGKey(0)
    key, xkey = jax.random.split(key)
    x = jax.random.normal(xkey, (2, 4, 16, 16), dtype=jnp.float32)  # NCHW

    weights = init_critic_weights(key, cf, ck)
    w_mats = prepare_weight_mats(weights)

    fwd = jax.jit(lambda xx, wm: critic_forward(xx, wm, cf, ck, cs, cp))
    out = jax.block_until_ready(fwd(x, w_mats))
    assert out.shape == (2, cf[-1], 1, 1), out.shape

    # Reference with matching numerics (bf16 MXU inputs, f32 accumulation,
    # bf16 inter-layer activations) using XLA's conv.
    ref = x
    for lay, w in enumerate(weights):
        ref = lax.conv_general_dilated(
            ref.astype(jnp.bfloat16), w.astype(jnp.bfloat16),
            window_strides=(cs[lay], cs[lay]),
            padding=[(cp[lay], cp[lay]), (cp[lay], cp[lay])],
            dimension_numbers=("NCHW", "OIHW", "NCHW"),
            preferred_element_type=jnp.float32,
        )
        if lay != len(weights) - 1:
            ref = jnp.maximum(ref, 0.0)
    ref = jax.block_until_ready(ref)
    assert jnp.allclose(out, ref, atol=1e-4, rtol=1e-2), (
        "mismatch vs reference, max abs diff = %e"
        % float(jnp.max(jnp.abs(out - ref))))

    print("KERNEL_OK")
</pallas_src>

<mosaic_0001>
module attributes {stable_mosaic.version = 11 : i64} {
  func.func @_matmul_relu_kernel(%arg0: i32, %arg1: i32, %arg2: i32, %arg3: memref<64x64xbf16, #tpu.memory_space<vmem>>, %arg4: memref<64x128xbf16, #tpu.memory_space<vmem>>, %arg5: memref<64x128xbf16, #tpu.memory_space<vmem>>, %arg6: memref<64x128xf32, #tpu.memory_space<vmem>>) attributes {dimension_semantics = [#tpu.dimension_semantics<parallel>, #tpu.dimension_semantics<parallel>, #tpu.dimension_semantics<arbitrary>], iteration_bounds = array<i64: 1, 2, 1>, scalar_prefetch = 0 : i64, scratch_operands = 1 : i64, tpu.core_type = #tpu.core_type<tc>, window_params = [{transform_indices = @transform_0, window_bounds = array<i64: 64, 64>}, {transform_indices = @transform_1, window_bounds = array<i64: 64, 128>}, {transform_indices = @transform_2, window_bounds = array<i64: 64, 128>}]} {
    %c0_i32 = arith.constant 0 : i32
    %0 = arith.cmpi eq, %arg2, %c0_i32 : i32
    %1 = arith.extui %0 : i1 to i32
    %c0_i32_0 = arith.constant 0 : i32
    %2 = arith.cmpi ne, %1, %c0_i32_0 : i32
    scf.if %2 {
      %cst_10 = arith.constant 0.000000e+00 : f32
      %12 = vector.broadcast %cst_10 : f32 to vector<64x128xf32>
      %c0_11 = arith.constant 0 : index
      %c0_12 = arith.constant 0 : index
      %13 = vector.load %arg6[%c0_11, %c0_12] : memref<64x128xf32, #tpu.memory_space<vmem>>, vector<64x128xf32>
      tpu.vector_store %arg6[%c0_11, %c0_12], %12 {strides = array<i32>} : memref<64x128xf32, #tpu.memory_space<vmem>>, vector<64x128xf32>,
    } else {
    }
    %c0 = arith.constant 0 : index
    %c0_1 = arith.constant 0 : index
    %3 = vector.load %arg6[%c0, %c0_1] : memref<64x128xf32, #tpu.memory_space<vmem>>, vector<64x128xf32>
    %c0_2 = arith.constant 0 : index
    %c0_3 = arith.constant 0 : index
    %4 = vector.load %arg3[%c0_2, %c0_3] : memref<64x64xbf16, #tpu.memory_space<vmem>>, vector<64x64xbf16>
    %c0_4 = arith.constant 0 : index
    %c0_5 = arith.constant 0 : index
    %5 = vector.load %arg4[%c0_4, %c0_5] : memref<64x128xbf16, #tpu.memory_space<vmem>>, vector<64x128xbf16>
    %cst = arith.constant dense<0.000000e+00> : vector<64x128xf32>
    %6 = tpu.matmul %4, %5, %cst {dimension_numbers = #tpu.dot_dimension_numbers<[1], [0], [0], [1], [0, 0, 1, 1], [], []>} : vector<64x64xbf16>, vector<64x128xbf16>, vector<64x128xf32> -> vector<64x128xf32>
    %7 = arith.addf %3, %6 : vector<64x128xf32>
    %c0_6 = arith.constant 0 : index
    %c0_7 = arith.constant 0 : index
    %8 = vector.load %arg6[%c0_6, %c0_7] : memref<64x128xf32, #tpu.memory_space<vmem>>, vector<64x128xf32>
    tpu.vector_store %arg6[%c0_6, %c0_7], %7 {strides = array<i32>} : memref<64x128xf32, #tpu.memory_space<vmem>>, vector<64x128xf32>,
    %c0_i32_8 = arith.constant 0 : i32
    %9 = arith.cmpi eq, %arg2, %c0_i32_8 : i32
    %10 = arith.extui %9 : i1 to i32
    %c0_i32_9 = arith.constant 0 : i32
    %11 = arith.cmpi ne, %10, %c0_i32_9 : i32
    scf.if %11 {
      %c0_10 = arith.constant 0 : index
      %c0_11 = arith.constant 0 : index
      %12 = vector.load %arg6[%c0_10, %c0_11] : memref<64x128xf32, #tpu.memory_space<vmem>>, vector<64x128xf32>
      %cst_12 = arith.constant 0.000000e+00 : f32
      %13 = vector.broadcast %cst_12 : f32 to vector<64x128xf32>
      %14 = arith.maximumf %12, %13 : vector<64x128xf32>
      %15 = arith.truncf %14 : vector<64x128xf32> to vector<64x128xbf16>
      %c0_13 = arith.constant 0 : index
      %c0_14 = arith.constant 0 : index
      %16 = vector.load %arg5[%c0_13, %c0_14] : memref<64x128xbf16, #tpu.memory_space<vmem>>, vector<64x128xbf16>
      tpu.vector_store %arg5[%c0_13, %c0_14], %15 {strides = array<i32>} : memref<64x128xbf16, #tpu.memory_space<vmem>>, vector<64x128xbf16>,
    } else {
    }
    return
  }
  func.func @transform_0(%arg0: i32, %arg1: i32, %arg2: i32) -> (i32, i32) {
    %c0_i32 = arith.constant 0 : i32
    return %arg1, %arg2 : i32, i32
  }
  func.func @transform_1(%arg0: i32, %arg1: i32, %arg2: i32) -> (i32, i32) {
    %c0_i32 = arith.constant 0 : i32
    return %arg2, %arg0 : i32, i32
  }
  func.func @transform_2(%arg0: i32, %arg1: i32, %arg2: i32) -> (i32, i32) {
    %c0_i32 = arith.constant 0 : i32
    return %arg1, %arg0 : i32, i32
  }
}

module attributes {stable_mosaic.version = 11 : i64} {
  func.func @_matmul_relu_kernel(%arg0: i32, %arg1: i32, %arg2: i32, %arg3: memref<16x128xbf16, #tpu.memory_space<vmem>>, %arg4: memref<128x128xbf16, #tpu.memory_space<vmem>>, %arg5: memref<16x128xbf16, #tpu.memory_space<vmem>>, %arg6: memref<16x128xf32, #tpu.memory_space<vmem>>) attributes {dimension_semantics = [#tpu.dimension_semantics<parallel>, #tpu.dimension_semantics<parallel>, #tpu.dimension_semantics<arbitrary>], iteration_bounds = array<i64: 1, 2, 1>, scalar_prefetch = 0 : i64, scratch_operands = 1 : i64, tpu.core_type = #tpu.core_type<tc>, window_params = [{transform_indices = @transform_0, window_bounds = array<i64: 16, 128>}, {transform_indices = @transform_1, window_bounds = array<i64: 128, 128>}, {transform_indices = @transform_2, window_bounds = array<i64: 16, 128>}]} {
    %c0_i32 = arith.constant 0 : i32
    %0 = arith.cmpi eq, %arg2, %c0_i32 : i32
    %1 = arith.extui %0 : i1 to i32
    %c0_i32_0 = arith.constant 0 : i32
    %2 = arith.cmpi ne, %1, %c0_i32_0 : i32
    scf.if %2 {
      %cst_10 = arith.constant 0.000000e+00 : f32
      %12 = vector.broadcast %cst_10 : f32 to vector<16x128xf32>
      %c0_11 = arith.constant 0 : index
      %c0_12 = arith.constant 0 : index
      %13 = vector.load %arg6[%c0_11, %c0_12] : memref<16x128xf32, #tpu.memory_space<vmem>>, vector<16x128xf32>
      tpu.vector_store %arg6[%c0_11, %c0_12], %12 {strides = array<i32>} : memref<16x128xf32, #tpu.memory_space<vmem>>, vector<16x128xf32>,
    } else {
    }
    %c0 = arith.constant 0 : index
    %c0_1 = arith.constant 0 : index
    %3 = vector.load %arg6[%c0, %c0_1] : memref<16x128xf32, #tpu.memory_space<vmem>>, vector<16x128xf32>
    %c0_2 = arith.constant 0 : index
    %c0_3 = arith.constant 0 : index
    %4 = vector.load %arg3[%c0_2, %c0_3] : memref<16x128xbf16, #tpu.memory_space<vmem>>, vector<16x128xbf16>
    %c0_4 = arith.constant 0 : index
    %c0_5 = arith.constant 0 : index
    %5 = vector.load %arg4[%c0_4, %c0_5] : memref<128x128xbf16, #tpu.memory_space<vmem>>, vector<128x128xbf16>
    %cst = arith.constant dense<0.000000e+00> : vector<16x128xf32>
    %6 = tpu.matmul %4, %5, %cst {dimension_numbers = #tpu.dot_dimension_numbers<[1], [0], [0], [1], [0, 0, 1, 1], [], []>} : vector<16x128xbf16>, vector<128x128xbf16>, vector<16x128xf32> -> vector<16x128xf32>
    %7 = arith.addf %3, %6 : vector<16x128xf32>
    %c0_6 = arith.constant 0 : index
    %c0_7 = arith.constant 0 : index
    %8 = vector.load %arg6[%c0_6, %c0_7] : memref<16x128xf32, #tpu.memory_space<vmem>>, vector<16x128xf32>
    tpu.vector_store %arg6[%c0_6, %c0_7], %7 {strides = array<i32>} : memref<16x128xf32, #tpu.memory_space<vmem>>, vector<16x128xf32>,
    %c0_i32_8 = arith.constant 0 : i32
    %9 = arith.cmpi eq, %arg2, %c0_i32_8 : i32
    %10 = arith.extui %9 : i1 to i32
    %c0_i32_9 = arith.constant 0 : i32
    %11 = arith.cmpi ne, %10, %c0_i32_9 : i32
    scf.if %11 {
      %c0_10 = arith.constant 0 : index
      %c0_11 = arith.constant 0 : index
      %12 = vector.load %arg6[%c0_10, %c0_11] : memref<16x128xf32, #tpu.memory_space<vmem>>, vector<16x128xf32>
      %cst_12 = arith.constant 0.000000e+00 : f32
      %13 = vector.broadcast %cst_12 : f32 to vector<16x128xf32>
      %14 = arith.maximumf %12, %13 : vector<16x128xf32>
      %15 = arith.truncf %14 : vector<16x128xf32> to vector<16x128xbf16>
      %c0_13 = arith.constant 0 : index
      %c0_14 = arith.constant 0 : index
      %16 = vector.load %arg5[%c0_13, %c0_14] : memref<16x128xbf16, #tpu.memory_space<vmem>>, vector<16x128xbf16>
      tpu.vector_store %arg5[%c0_13, %c0_14], %15 {strides = array<i32>} : memref<16x128xbf16, #tpu.memory_space<vmem>>, vector<16x128xbf16>,
    } else {
    }
    return
  }
  func.func @transform_0(%arg0: i32, %arg1: i32, %arg2: i32) -> (i32, i32) {
    %c0_i32 = arith.constant 0 : i32
    return %arg1, %arg2 : i32, i32
  }
  func.func @transform_1(%arg0: i32, %arg1: i32, %arg2: i32) -> (i32, i32) {
    %c0_i32 = arith.constant 0 : i32
    return %arg2, %arg0 : i32, i32
  }
  func.func @transform_2(%arg0: i32, %arg1: i32, %arg2: i32) -> (i32, i32) {
    %c0_i32 = arith.constant 0 : i32
    return %arg1, %arg0 : i32, i32
  }
}

module attributes {stable_mosaic.version = 11 : i64} {
  func.func @_matmul_relu_kernel(%arg0: i32, %arg1: i32, %arg2: i32, %arg3: memref<2x256xbf16, #tpu.memory_space<vmem>>, %arg4: memref<256x128xbf16, #tpu.memory_space<vmem>>, %arg5: memref<2x128xf32, #tpu.memory_space<vmem>>, %arg6: memref<2x128xf32, #tpu.memory_space<vmem>>) attributes {dimension_semantics = [#tpu.dimension_semantics<parallel>, #tpu.dimension_semantics<parallel>, #tpu.dimension_semantics<arbitrary>], iteration_bounds = array<i64: 1, 1, 1>, scalar_prefetch = 0 : i64, scratch_operands = 1 : i64, tpu.core_type = #tpu.core_type<tc>, window_params = [{transform_indices = @transform_0, window_bounds = array<i64: 2, 256>}, {transform_indices = @transform_1, window_bounds = array<i64: 256, 128>}, {transform_indices = @transform_2, window_bounds = array<i64: 2, 128>}]} {
    %c0_i32 = arith.constant 0 : i32
    %0 = arith.cmpi eq, %arg2, %c0_i32 : i32
    %1 = arith.extui %0 : i1 to i32
    %c0_i32_0 = arith.constant 0 : i32
    %2 = arith.cmpi ne, %1, %c0_i32_0 : i32
    scf.if %2 {
      %cst_10 = arith.constant 0.000000e+00 : f32
      %12 = vector.broadcast %cst_10 : f32 to vector<2x128xf32>
      %c0_11 = arith.constant 0 : index
      %c0_12 = arith.constant 0 : index
      %13 = vector.load %arg6[%c0_11, %c0_12] : memref<2x128xf32, #tpu.memory_space<vmem>>, vector<2x128xf32>
      tpu.vector_store %arg6[%c0_11, %c0_12], %12 {strides = array<i32>} : memref<2x128xf32, #tpu.memory_space<vmem>>, vector<2x128xf32>,
    } else {
    }
    %c0 = arith.constant 0 : index
    %c0_1 = arith.constant 0 : index
    %3 = vector.load %arg6[%c0, %c0_1] : memref<2x128xf32, #tpu.memory_space<vmem>>, vector<2x128xf32>
    %c0_2 = arith.constant 0 : index
    %c0_3 = arith.constant 0 : index
    %4 = vector.load %arg3[%c0_2, %c0_3] : memref<2x256xbf16, #tpu.memory_space<vmem>>, vector<2x256xbf16>
    %c0_4 = arith.constant 0 : index
    %c0_5 = arith.constant 0 : index
    %5 = vector.load %arg4[%c0_4, %c0_5] : memref<256x128xbf16, #tpu.memory_space<vmem>>, vector<256x128xbf16>
    %cst = arith.constant dense<0.000000e+00> : vector<2x128xf32>
    %6 = tpu.matmul %4, %5, %cst {dimension_numbers = #tpu.dot_dimension_numbers<[1], [0], [0], [1], [0, 0, 1, 1], [], []>} : vector<2x256xbf16>, vector<256x128xbf16>, vector<2x128xf32> -> vector<2x128xf32>
    %7 = arith.addf %3, %6 : vector<2x128xf32>
    %c0_6 = arith.constant 0 : index
    %c0_7 = arith.constant 0 : index
    %8 = vector.load %arg6[%c0_6, %c0_7] : memref<2x128xf32, #tpu.memory_space<vmem>>, vector<2x128xf32>
    tpu.vector_store %arg6[%c0_6, %c0_7], %7 {strides = array<i32>} : memref<2x128xf32, #tpu.memory_space<vmem>>, vector<2x128xf32>,
    %c0_i32_8 = arith.constant 0 : i32
    %9 = arith.cmpi eq, %arg2, %c0_i32_8 : i32
    %10 = arith.extui %9 : i1 to i32
    %c0_i32_9 = arith.constant 0 : i32
    %11 = arith.cmpi ne, %10, %c0_i32_9 : i32
    scf.if %11 {
      %c0_10 = arith.constant 0 : index
      %c0_11 = arith.constant 0 : index
      %12 = vector.load %arg6[%c0_10, %c0_11] : memref<2x128xf32, #tpu.memory_space<vmem>>, vector<2x128xf32>
      %c0_12 = arith.constant 0 : index
      %c0_13 = arith.constant 0 : index
      %13 = vector.load %arg5[%c0_12, %c0_13] : memref<2x128xf32, #tpu.memory_space<vmem>>, vector<2x128xf32>
      tpu.vector_store %arg5[%c0_12, %c0_13], %12 {strides = array<i32>} : memref<2x128xf32, #tpu.memory_space<vmem>>, vector<2x128xf32>,
    } else {
    }
    return
  }
  func.func @transform_0(%arg0: i32, %arg1: i32, %arg2: i32) -> (i32, i32) {
    %c0_i32 = arith.constant 0 : i32
    return %arg1, %arg2 : i32, i32
  }
  func.func @transform_1(%arg0: i32, %arg1: i32, %arg2: i32) -> (i32, i32) {
    %c0_i32 = arith.constant 0 : i32
    return %arg2, %arg0 : i32, i32
  }
  func.func @transform_2(%arg0: i32, %arg1: i32, %arg2: i32) -> (i32, i32) {
    %c0_i32 = arith.constant 0 : i32
    return %arg1, %arg0 : i32, i32
  }
}

</mosaic_0001>

<llo_original>
// kernel: _lambda_.3
$region0: #{_lambda_.3}
  #allocation0 [shape = 'u32[]', space=smem, size = 0x4, offset = 0x4, fixed_abs, tag = 'smem constant byte address 0x4 - core index']
  #allocation1 [shape = 'u32[72,128]{1,0:T(1,128)}', space=vmem, size = 0x9000, scoped, tag = 'internal scratch']
  #allocation2 [shape = 'f32[64,128]{1,0:T(8,128)}', space=vmem, size = 0x8000, scoped, tag = 'scratch operand']
  %s0 = inlined_call_operand.vmem [shape: bf16[128,64], index: 0, kind: input, shape index: {}]
  %s1 = inlined_call_operand.vmem [shape: bf16[64,128], index: 1, kind: input, shape index: {}]
  %s2 = inlined_call_operand.vmem [shape: bf16[128,128], index: 2, kind: output, shape index: {}]
  %s3 = sld [smem:[#allocation0]]
  $region49: #{_lambda_.3} parent=0
    _
  %s5 = ssub.s32 1, %s3
  %s6 = scalar_select 0, %s5, %s3
  loop: start=0, step=1, limit=4
  $region2: #{_lambda_.3} parent=0 // loop_pre_header
    _
  $region3: #{_lambda_.3} parent=0 // loop_header
    %s8 = sphi 0, %s12
    %p9 = scmp.ge.s32.totalorder %s8, 4
    %s15 = sphi 0, %s34
    %s16 = sphi 0, %s30
    %s17 = sphi 0, %s26
    %s18 = sphi 0, %s15
    %s19 = sphi 0, %s16
    %s20 = sphi 0, %s17
    %s21 = sphi 0, %s18
    %s22 = sphi 0, %s19
    %s23 = sphi 0, %s20
    %s39 = sphi 0, %s41
    %s42 = sphi 0, %s39
    %s43 = sphi 0, %s42
    %s59 = sphi 0, %s43
    %s67 = sphi 0, %s69
    %s70 = sphi 0, %s67
    %s71 = sphi 0, %s70
    %s87 = sphi 0, %s71
    %s95 = sphi 0, %s97
    %s98 = sphi 0, %s95
    %s99 = sphi 0, %s98
    %s115 = sphi 0, %s99
  $region4: #{_lambda_.3} parent=0 // loop_header_branch
    %11 = sbr.rel (%p9) target = $region8
  $region5: #{_lambda_.3} parent=0 // loop_body
    %s13 = ssub.s32 %s8, 1
    %s14 = ssub.s32 %s8, 2
    %s24 = sadd.s32 1, %s17
    %p25 = scmp.ge.s32.totalorder %s24, 1
    %s26 = scalar_select %p25, 0, %s24
    %s27 = sadd.s32 1, %s16
    %s28 = scalar_select %p25, %s27, %s16
    %p29 = scmp.ge.s32.totalorder %s28, 2
    %s30 = scalar_select %p29, 0, %s28
    %s31 = sadd.s32 1, %s15
    %s32 = scalar_select %p29, %s31, %s15
    %p33 = scmp.ge.s32.totalorder %s32, 1
    %s34 = scalar_select %p33, 0, %s32
    %s35 = ssub.s32 %s16, %s30
    %s36 = ssub.s32 %s17, %s26
    %s37 = sor.u32 %s35, %s36
    %p38 = scmp.eq.s32.totalorder %s37, 0
    %s40 = sadd.s32 %s39, 1
    %s41 = scalar_select %p38, %s39, %s40
    %p44 = pneg %p38
    %p45 = scmp.eq.s32.totalorder %s8, 1
    %p46 = por %p44, %p45
    %p47 = scmp.ne.s32.totalorder %s39, %s42
    %p48 = scmp.eq.s32.totalorder %s8, 0
    %p49 = por %p47, %p48
    %p50 = scmp.ne.s32.totalorder %s39, %s42
    %p51 = scmp.eq.s32.totalorder %s13, 1
    %p52 = por %p50, %p51
    %p53 = scmp.ne.s32.totalorder %s42, %s43
    %p54 = scmp.eq.s32.totalorder %s13, 0
    %p55 = por %p53, %p54
    %p56 = scmp.ne.s32.totalorder %s42, %s43
    %p57 = scmp.eq.s32.totalorder %s14, 1
    %p58 = por %p56, %p57
    %p60 = scmp.ne.s32.totalorder %s43, %s59
    %p61 = scmp.eq.s32.totalorder %s14, 0
    %p62 = por %p60, %p61
    %s63 = ssub.s32 %s17, %s26
    %s64 = ssub.s32 %s15, %s34
    %s65 = sor.u32 %s63, %s64
    %p66 = scmp.eq.s32.totalorder %s65, 0
    %s68 = sadd.s32 %s67, 1
    %s69 = scalar_select %p66, %s67, %s68
    %p72 = pneg %p66
    %p73 = scmp.eq.s32.totalorder %s8, 1
    %p74 = por %p72, %p73
    %p75 = scmp.ne.s32.totalorder %s67, %s70
    %p76 = scmp.eq.s32.totalorder %s8, 0
    %p77 = por %p75, %p76
    %p78 = scmp.ne.s32.totalorder %s67, %s70
    %p79 = scmp.eq.s32.totalorder %s13, 1
    %p80 = por %p78, %p79
    %p81 = scmp.ne.s32.totalorder %s70, %s71
    %p82 = scmp.eq.s32.totalorder %s13, 0
    %p83 = por %p81, %p82
    %p84 = scmp.ne.s32.totalorder %s70, %s71
    %p85 = scmp.eq.s32.totalorder %s14, 1
    %p86 = por %p84, %p85
    %p88 = scmp.ne.s32.totalorder %s71, %s87
    %p89 = scmp.eq.s32.totalorder %s14, 0
    %p90 = por %p88, %p89
    %s91 = ssub.s32 %s16, %s30
    %s92 = ssub.s32 %s15, %s34
    %s93 = sor.u32 %s91, %s92
    %p94 = scmp.eq.s32.totalorder %s93, 0
    %s96 = sadd.s32 %s95, 1
    %s97 = scalar_select %p94, %s95, %s96
    %p100 = pneg %p94
    %p101 = scmp.eq.s32.totalorder %s8, 1
    %p102 = por %p100, %p101
    %p103 = scmp.ne.s32.totalorder %s95, %s98
    %p104 = scmp.eq.s32.totalorder %s8, 0
    %p105 = por %p103, %p104
    %p106 = scmp.ne.s32.totalorder %s95, %s98
    %p107 = scmp.eq.s32.totalorder %s13, 1
    %p108 = por %p106, %p107
    %p109 = scmp.ne.s32.totalorder %s98, %s99
    %p110 = scmp.eq.s32.totalorder %s13, 0
    %p111 = por %p109, %p110
    %p112 = scmp.ne.s32.totalorder %s98, %s99
    %p113 = scmp.eq.s32.totalorder %s14, 1
    %p114 = por %p112, %p113
    %p116 = scmp.ne.s32.totalorder %s99, %s115
    %p117 = scmp.eq.s32.totalorder %s14, 0
    %p118 = por %p116, %p117
    %p119 = scmp.le.s32.totalorder 1, %s8
    %p120 = scmp.lt.s32.totalorder %s8, 3
    %p121 = pnand %p119, %p120
    %p122 = pneg %p121
    // Predicated region
    $region9: #{_lambda_.3} parent=5 // pred_check
      _
    $region10: #{_lambda_.3} parent=5 // pred_check_branch
      %124 = sbr.rel (%p121) target = $region12
    $region11: #{_lambda_.3} parent=5 // pred_region
      %s125 = ssub.s32 %s8, 1
      // Predicated region
      $region13: #{_lambda_.3} parent=11 // pred_check
        %p126 = pneg %p83
      $region14: #{_lambda_.3} parent=11 // pred_check_branch
        %128 = sbr.rel (%p126) target = $region16
      $region15: #{_lambda_.3} parent=11 // pred_region
        %s129 = smul.u32 8, %s20
        %p130 = scmp.lt.s32.totalorder %s129, 7
        %s131 = scalar_select %p130, %s129, 7
        %p132 = scmp.lt.s32.totalorder %s18, 0
        %s133 = scalar_select %p132, %s18, 0
        %s134 = sadd.s32 %s133, %s131
        %s135 = smul.addr %s134, 4
        %s136 = scalar_lea.vmem %s1, %s135
        %s137 = smul.u32 8, %s20
      $region16: #{_lambda_.3} parent=11 // pred_fallthru
        _
    $region12: #{_lambda_.3} parent=5 // pred_fallthru
      _
    %p138 = scmp.lt.s32.totalorder %s8, 2
    // Predicated region
    $region17: #{_lambda_.3} parent=5 // pred_check
      %p139 = pneg %p138
    $region18: #{_lambda_.3} parent=5 // pred_check_branch
      %141 = sbr.rel (%p139) target = $region20
    $region19: #{_lambda_.3} parent=5 // pred_region
      // Predicated region
      $region21: #{_lambda_.3} parent=19 // pred_check
        %p142 = pneg %p49
      $region22: #{_lambda_.3} parent=19 // pred_check_branch
        %144 = sbr.rel (%p142) target = $region24
      $region23: #{_lambda_.3} parent=19 // pred_region
        %s145 = smul.u32 8, %s16
        %p146 = scmp.lt.s32.totalorder %s145, 15
        %s147 = scalar_select %p146, %s145, 15
        %p148 = scmp.lt.s32.totalorder %s17, 0
        %s149 = scalar_select %p148, %s17, 0
        %s150 = sadd.s32 %s149, %s147
        %s151 = smul.addr %s150, 4
        %s152 = scalar_lea.vmem %s0, %s151
        %s153 = smul.u32 8, %s16
      $region24: #{_lambda_.3} parent=19 // pred_fallthru
        _
    $region20: #{_lambda_.3} parent=5 // pred_fallthru
      _
    %p154 = scmp.le.s32.totalorder 1, %s8
    %p155 = scmp.lt.s32.totalorder %s8, 3
    %p156 = pnand %p154, %p155
    %p157 = pneg %p156
    // Predicated region
    $region25: #{_lambda_.3} parent=5 // pred_check
      _
    $region26: #{_lambda_.3} parent=5 // pred_check_branch
      %159 = sbr.rel (%p156) target = $region28
    $region27: #{_lambda_.3} parent=5 // pred_region
      %s160 = ssub.s32 %s8, 1
      %s161 = smul.u32 8, %s19
      %p162 = scmp.lt.s32.totalorder %s161, 15
      %s163 = scalar_select %p162, %s161, 15
      %p164 = scmp.lt.s32.totalorder %s20, 0
      %s165 = scalar_select %p164, %s20, 0
      %s166 = sadd.s32 %s165, %s163
      %s167 = smul.addr %s166, 4
      %s168 = scalar_lea.vmem %s0, %s167
      %p169 = pneg %p55
      %p170 = pneg %p52
      %s171 = smul.u32 8, %s20
      %p172 = scmp.lt.s32.totalorder %s171, 7
      %s173 = scalar_select %p172, %s171, 7
      %p174 = scmp.lt.s32.totalorder %s18, 0
      %s175 = scalar_select %p174, %s18, 0
      %s176 = sadd.s32 %s175, %s173
      %s177 = smul.addr %s176, 4
      %s178 = scalar_lea.vmem %s1, %s177
      %p179 = pneg %p83
      %p180 = pneg %p80
      %p181 = pneg %p111
      %p182 = pneg %p108
      %s183 = smul.u32 8, %s19
      %p184 = scmp.lt.s32.totalorder %s183, 15
      %s185 = scalar_select %p184, %s183, 15
      %p186 = scmp.lt.s32.totalorder %s18, 0
      %s187 = scalar_select %p186, %s18, 0
      %s188 = sadd.s32 %s187, %s185
      %s189 = smul.addr %s188, 4
      %s190 = scalar_lea.vmem %s2, %s189
      %s191 = smul.u32 8, %s19
      %p192 = scmp.lt.s32.totalorder %s191, 15
      %s193 = scalar_select %p192, %s191, 15
      %p194 = scmp.lt.s32.totalorder %s20, 0
      %s195 = scalar_select %p194, %s20, 0
      %s196 = sadd.s32 %s195, %s193
      %s197 = smul.addr %s196, 4
      %s198 = scalar_lea.vmem %s0, %s197
      %s199 = smul.u32 8, %s19
      %s200 = smul.u32 8, %s20
      %p201 = scmp.lt.s32.totalorder %s200, 7
      %s202 = scalar_select %p201, %s200, 7
      %p203 = scmp.lt.s32.totalorder %s18, 0
      %s204 = scalar_select %p203, %s18, 0
      %s205 = sadd.s32 %s204, %s202
      %s206 = smul.addr %s205, 4
      %s207 = scalar_lea.vmem %s1, %s206
      %s208 = smul.u32 8, %s20
      %s209 = smul.u32 8, %s19
      %p210 = scmp.lt.s32.totalorder %s209, 15
      %s211 = scalar_select %p210, %s209, 15
      %p212 = scmp.lt.s32.totalorder %s18, 0
      %s213 = scalar_select %p212, %s18, 0
      %s214 = sadd.s32 %s213, %s211
      %s215 = smul.addr %s214, 4
      %s216 = scalar_lea.vmem %s2, %s215
      %s217 = smul.u32 8, %s19
      %p219 = scmp.eq.s32.totalorder %s20, 0
      // Predicated region
      $region29: #{_lambda_.3} parent=27 // pred_check
        %p220 = pneg %p219
      $region30: #{_lambda_.3} parent=27 // pred_check_branch
        %222 = sbr.rel (%p220) target = $region32
      $region31: #{_lambda_.3} parent=27 // pred_region
        %223 = vst [vmem:[#allocation2] sm:$0xff] 0.0
        %224 = vst [vmem:[#allocation2 + $0x8] sm:$0xff] 0.0
        %225 = vst [vmem:[#allocation2 + $0x10] sm:$0xff] 0.0
        %226 = vst [vmem:[#allocation2 + $0x18] sm:$0xff] 0.0
        %227 = vst [vmem:[#allocation2 + $0x20] sm:$0xff] 0.0
        %228 = vst [vmem:[#allocation2 + $0x28] sm:$0xff] 0.0
        %229 = vst [vmem:[#allocation2 + $0x30] sm:$0xff] 0.0
        %230 = vst [vmem:[#allocation2 + $0x38] sm:$0xff] 0.0
      $region32: #{_lambda_.3} parent=27 // pred_fallthru
        _
      %v231 = vld [vmem:[#allocation2] sm:$0xff]
      %v232 = vld [vmem:[#allocation2 + $0x8] sm:$0xff]
      %v233 = vld [vmem:[#allocation2 + $0x10] sm:$0xff]
      %v234 = vld [vmem:[#allocation2 + $0x18] sm:$0xff]
      %v235 = vld [vmem:[#allocation2 + $0x20] sm:$0xff]
      %v236 = vld [vmem:[#allocation2 + $0x28] sm:$0xff]
      %v237 = vld [vmem:[#allocation2 + $0x30] sm:$0xff]
      %v238 = vld [vmem:[#allocation2 + $0x38] sm:$0xff]
      %v239 = vld [vmem:[%s198] sm:$0xf]
      %v240 = vld [vmem:[%s198 + $0x4] sm:$0xf]
      %v241 = vld [vmem:[%s198 + $0x8] sm:$0xf]
      %v242 = vld [vmem:[%s198 + $0xc] sm:$0xf]
      %v243 = vld [vmem:[%s198 + $0x10] sm:$0xf]
      %v244 = vld [vmem:[%s198 + $0x14] sm:$0xf]
      %v245 = vld [vmem:[%s198 + $0x18] sm:$0xf]
      %v246 = vld [vmem:[%s198 + $0x1c] sm:$0xf]
      %v247 = vld [vmem:[%s207] sm:$0xf]
      %v248 = vld [vmem:[%s207 + $0x4] sm:$0xf]
      %v249 = vld [vmem:[%s207 + $0x8] sm:$0xf]
      %v250 = vld [vmem:[%s207 + $0xc] sm:$0xf]
      %v251 = vld [vmem:[%s207 + $0x10] sm:$0xf]
      %v252 = vld [vmem:[%s207 + $0x14] sm:$0xf]
      %v253 = vld [vmem:[%s207 + $0x18] sm:$0xf]
      %v254 = vld [vmem:[%s207 + $0x1c] sm:$0xf]
      %v263 = vunpack.c.l.b16 %v239
      %v264 = vunpack.c.l.b16 %v240
      %v265 = vunpack.c.l.b16 %v241
      %v266 = vunpack.c.l.b16 %v242
      %v267 = vunpack.c.l.b16 %v243
      %v268 = vunpack.c.l.b16 %v244
      %v269 = vunpack.c.l.b16 %v245
      %v270 = vunpack.c.l.b16 %v246
      %v271 = vpack.c.b16 %v264, %v263
      %v272 = vpack.c.b16 %v266, %v265
      %v273 = vpack.c.b16 %v268, %v267
      %v274 = vpack.c.b16 %v270, %v269
      %v283 = vunpack.c.l.b16 %v247
      %v284 = vunpack.c.l.b16 %v248
      %v285 = vunpack.c.l.b16 %v249
      %v286 = vunpack.c.l.b16 %v250
      %v287 = vunpack.c.l.b16 %v251
      %v288 = vunpack.c.l.b16 %v252
      %v289 = vunpack.c.l.b16 %v253
      %v290 = vunpack.c.l.b16 %v254
      %v291 = vpack.c.b16 %v284, %v283
      %v292 = vpack.c.b16 %v286, %v285
      %v293 = vpack.c.b16 %v288, %v287
      %v294 = vpack.c.b16 %v290, %v289
      %vm299 = vcmask 523264
      %v301 = vsel %vm299, %v271, 0
      %v304 = vsel %vm299, %v272, 0
      %v307 = vsel %vm299, %v273, 0
      %v310 = vsel %vm299, %v274, 0
      %312 = vmatpush.bf16.msra.mxu0 0
      %313 = vmatpush.bf16.msra.mxu0 0
      %314 = vmatpush.bf16.msra.mxu0 0
      %315 = vmatpush.bf16.msra.mxu0 0
      %316 = vmatpush.bf16.msra.mxu0 %v294
      %317 = vmatpush.bf16.msra.mxu0 %v293
      %318 = vmatpush.bf16.msra.mxu0 %v292
      %319 = vmatpush.bf16.msra.mxu0 %v291
      %320 = vmatmul.bf16.gmra.mxu0 %v301
      %v321 = vpop.f32.mrf.mxu0
      %v322 = vadd.f32 0.0, %v321
      %v323 = vpop.f32.mrf.mxu0
      %v324 = vadd.f32 0.0, %v323
      %325 = vmatmul.bf16.gmra.mxu0 %v304
      %v326 = vpop.f32.mrf.mxu0
      %v327 = vadd.f32 0.0, %v326
      %v328 = vpop.f32.mrf.mxu0
      %v329 = vadd.f32 0.0, %v328
      %330 = vmatmul.bf16.gmra.mxu0 %v307
      %v331 = vpop.f32.mrf.mxu0
      %v332 = vadd.f32 0.0, %v331
      %v333 = vpop.f32.mrf.mxu0
      %v334 = vadd.f32 0.0, %v333
      %335 = vmatmul.bf16.gmra.mxu0 %v310
      %v336 = vpop.f32.mrf.mxu0
      %v337 = vadd.f32 0.0, %v336
      %v338 = vpop.f32.mrf.mxu0
      %v339 = vadd.f32 0.0, %v338
      %340 = vdwg.mxu0
      %v341 = vadd.f32 %v231, %v322
      %v342 = vadd.f32 %v232, %v324
      %v343 = vadd.f32 %v233, %v327
      %v344 = vadd.f32 %v234, %v329
      %v345 = vadd.f32 %v235, %v332
      %v346 = vadd.f32 %v236, %v334
      %v347 = vadd.f32 %v237, %v337
      %v348 = vadd.f32 %v238, %v339
      %349 = vst [vmem:[#allocation2] sm:$0xff] %v341
      %350 = vst [vmem:[#allocation2 + $0x8] sm:$0xff] %v342
      %351 = vst [vmem:[#allocation2 + $0x10] sm:$0xff] %v343
      %352 = vst [vmem:[#allocation2 + $0x18] sm:$0xff] %v344
      %353 = vst [vmem:[#allocation2 + $0x20] sm:$0xff] %v345
      %354 = vst [vmem:[#allocation2 + $0x28] sm:$0xff] %v346
      %355 = vst [vmem:[#allocation2 + $0x30] sm:$0xff] %v347
      %356 = vst [vmem:[#allocation2 + $0x38] sm:$0xff] %v348
      // Predicated region
      $region33: #{_lambda_.3} parent=27 // pred_check
        %p357 = pneg %p219
      $region34: #{_lambda_.3} parent=27 // pred_check_branch
        %359 = sbr.rel (%p357) target = $region36
      $region35: #{_lambda_.3} parent=27 // pred_region
        %v360 = vld [vmem:[#allocation2] sm:$0xff]
        %v361 = vld [vmem:[#allocation2 + $0x8] sm:$0xff]
        %v362 = vld [vmem:[#allocation2 + $0x10] sm:$0xff]
        %v363 = vld [vmem:[#allocation2 + $0x18] sm:$0xff]
        %v364 = vld [vmem:[#allocation2 + $0x20] sm:$0xff]
        %v365 = vld [vmem:[#allocation2 + $0x28] sm:$0xff]
        %v366 = vld [vmem:[#allocation2 + $0x30] sm:$0xff]
        %v367 = vld [vmem:[#allocation2 + $0x38] sm:$0xff]
        %v368 = vmax.f32 %v360, 0.0
        %v369 = vmax.f32 %v361, 0.0
        %v370 = vmax.f32 %v362, 0.0
        %v371 = vmax.f32 %v363, 0.0
        %v372 = vmax.f32 %v364, 0.0
        %v373 = vmax.f32 %v365, 0.0
        %v374 = vmax.f32 %v366, 0.0
        %v375 = vmax.f32 %v367, 0.0
        %v376 = vpack.c.bf16 %v368, %v368
        %v377 = vpack.c.bf16 %v369, %v369
        %v378 = vpack.c.bf16 %v370, %v370
        %v379 = vpack.c.bf16 %v371, %v371
        %v380 = vpack.c.bf16 %v372, %v372
        %v381 = vpack.c.bf16 %v373, %v373
        %v382 = vpack.c.bf16 %v374, %v374
        %v383 = vpack.c.bf16 %v375, %v375
        %384 = vst [vmem:[%s216] sm:$0xf] %v376
        %385 = vst [vmem:[%s216 + $0x4] sm:$0xf] %v377
        %386 = vst [vmem:[%s216 + $0x8] sm:$0xf] %v378
        %387 = vst [vmem:[%s216 + $0xc] sm:$0xf] %v379
        %388 = vst [vmem:[%s216 + $0x10] sm:$0xf] %v380
        %389 = vst [vmem:[%s216 + $0x14] sm:$0xf] %v381
        %390 = vst [vmem:[%s216 + $0x18] sm:$0xf] %v382
        %391 = vst [vmem:[%s216 + $0x1c] sm:$0xf] %v383
      $region36: #{_lambda_.3} parent=27 // pred_fallthru
        _
      %s392 = smul.u32 8, %s19
      %p393 = scmp.lt.s32.totalorder %s392, 15
      %s394 = scalar_select %p393, %s392, 15
      %p395 = scmp.lt.s32.totalorder %s18, 0
      %s396 = scalar_select %p395, %s18, 0
      %s397 = sadd.s32 %s396, %s394
      %s398 = smul.addr %s397, 4
      %s399 = scalar_lea.vmem %s2, %s398
      // Predicated region
      $region37: #{_lambda_.3} parent=27 // pred_check
        %p400 = pneg %p108
      $region38: #{_lambda_.3} parent=27 // pred_check_branch
        %402 = sbr.rel (%p400) target = $region40
      $region39: #{_lambda_.3} parent=27 // pred_region
        %s403 = smul.u32 8, %s19
      $region40: #{_lambda_.3} parent=27 // pred_fallthru
        _
    $region28: #{_lambda_.3} parent=5 // pred_fallthru
      _
    %p404 = scmp.le.s32.totalorder 2, %s8
    // Predicated region
    $region41: #{_lambda_.3} parent=5 // pred_check
      %p405 = pneg %p404
    $region42: #{_lambda_.3} parent=5 // pred_check_branch
      %407 = sbr.rel (%p405) target = $region44
    $region43: #{_lambda_.3} parent=5 // pred_region
      %s408 = ssub.s32 %s8, 2
      // Predicated region
      $region45: #{_lambda_.3} parent=43 // pred_check
        %p409 = pneg %p114
      $region46: #{_lambda_.3} parent=43 // pred_check_branch
        %411 = sbr.rel (%p409) target = $region48
      $region47: #{_lambda_.3} parent=43 // pred_region
        %s412 = smul.u32 8, %s22
        %p413 = scmp.lt.s32.totalorder %s412, 15
        %s414 = scalar_select %p413, %s412, 15
        %p415 = scmp.lt.s32.totalorder %s21, 0
        %s416 = scalar_select %p415, %s21, 0
        %s417 = sadd.s32 %s416, %s414
        %s418 = smul.addr %s417, 4
        %s419 = scalar_lea.vmem %s2, %s418
      $region48: #{_lambda_.3} parent=43 // pred_fallthru
        _
    $region44: #{_lambda_.3} parent=5 // pred_fallthru
      _
  $region6: #{_lambda_.3} parent=0 // loop_footer
    %s12 = sadd.s32 1, %s8
  $region7: #{_lambda_.3} parent=0 // loop_footer_branch
    %7 = sbr.rel target = $region3
  $region8: #{_lambda_.3} parent=0 // loop_exit
    _

// kernel: _lambda_.4
$region0: #{_lambda_.4}
  #allocation0 [shape = 'u32[]', space=smem, size = 0x4, offset = 0x4, fixed_abs, tag = 'smem constant byte address 0x4 - core index']
  #allocation1 [shape = 'u32[72,128]{1,0:T(1,128)}', space=vmem, size = 0x9000, scoped, tag = 'internal scratch']
  #allocation2 [shape = 'f32[16,128]{1,0:T(8,128)}', space=vmem, size = 0x2000, scoped, tag = 'scratch operand']
  %s0 = inlined_call_operand.vmem [shape: bf16[32,128], index: 0, kind: input, shape index: {}]
  %s1 = inlined_call_operand.vmem [shape: bf16[128,128], index: 1, kind: input, shape index: {}]
  %s2 = inlined_call_operand.vmem [shape: bf16[32,128], index: 2, kind: output, shape index: {}]
  %s3 = sld [smem:[#allocation0]]
  $region49: #{_lambda_.4} parent=0
    _
  %s5 = ssub.s32 1, %s3
  %s6 = scalar_select 0, %s5, %s3
  loop: start=0, step=1, limit=4
  $region2: #{_lambda_.4} parent=0 // loop_pre_header
    _
  $region3: #{_lambda_.4} parent=0 // loop_header
    %s8 = sphi 0, %s12
    %p9 = scmp.ge.s32.totalorder %s8, 4
    %s15 = sphi 0, %s34
    %s16 = sphi 0, %s30
    %s17 = sphi 0, %s26
    %s18 = sphi 0, %s15
    %s19 = sphi 0, %s16
    %s20 = sphi 0, %s17
    %s21 = sphi 0, %s18
    %s22 = sphi 0, %s19
    %s23 = sphi 0, %s20
    %s39 = sphi 0, %s41
    %s42 = sphi 0, %s39
    %s43 = sphi 0, %s42
    %s59 = sphi 0, %s43
    %s67 = sphi 0, %s69
    %s70 = sphi 0, %s67
    %s71 = sphi 0, %s70
    %s87 = sphi 0, %s71
    %s95 = sphi 0, %s97
    %s98 = sphi 0, %s95
    %s99 = sphi 0, %s98
    %s115 = sphi 0, %s99
  $region4: #{_lambda_.4} parent=0 // loop_header_branch
    %11 = sbr.rel (%p9) target = $region8
  $region5: #{_lambda_.4} parent=0 // loop_body
    %s13 = ssub.s32 %s8, 1
    %s14 = ssub.s32 %s8, 2
    %s24 = sadd.s32 1, %s17
    %p25 = scmp.ge.s32.totalorder %s24, 1
    %s26 = scalar_select %p25, 0, %s24
    %s27 = sadd.s32 1, %s16
    %s28 = scalar_select %p25, %s27, %s16
    %p29 = scmp.ge.s32.totalorder %s28, 2
    %s30 = scalar_select %p29, 0, %s28
    %s31 = sadd.s32 1, %s15
    %s32 = scalar_select %p29, %s31, %s15
    %p33 = scmp.ge.s32.totalorder %s32, 1
    %s34 = scalar_select %p33, 0, %s32
    %s35 = ssub.s32 %s16, %s30
    %s36 = ssub.s32 %s17, %s26
    %s37 = sor.u32 %s35, %s36
    %p38 = scmp.eq.s32.totalorder %s37, 0
    %s40 = sadd.s32 %s39, 1
    %s41 = scalar_select %p38, %s39, %s40
    %p44 = pneg %p38
    %p45 = scmp.eq.s32.totalorder %s8, 1
    %p46 = por %p44, %p45
    %p47 = scmp.ne.s32.totalorder %s39, %s42
    %p48 = scmp.eq.s32.totalorder %s8, 0
    %p49 = por %p47, %p48
    %p50 = scmp.ne.s32.totalorder %s39, %s42
    %p51 = scmp.eq.s32.totalorder %s13, 1
    %p52 = por %p50, %p51
    %p53 = scmp.ne.s32.totalorder %s42, %s43
    %p54 = scmp.eq.s32.totalorder %s13, 0
    %p55 = por %p53, %p54
    %p56 = scmp.ne.s32.totalorder %s42, %s43
    %p57 = scmp.eq.s32.totalorder %s14, 1
    %p58 = por %p56, %p57
    %p60 = scmp.ne.s32.totalorder %s43, %s59
    %p61 = scmp.eq.s32.totalorder %s14, 0
    %p62 = por %p60, %p61
    %s63 = ssub.s32 %s17, %s26
    %s64 = ssub.s32 %s15, %s34
    %s65 = sor.u32 %s63, %s64
    %p66 = scmp.eq.s32.totalorder %s65, 0
    %s68 = sadd.s32 %s67, 1
    %s69 = scalar_select %p66, %s67, %s68
    %p72 = pneg %p66
    %p73 = scmp.eq.s32.totalorder %s8, 1
    %p74 = por %p72, %p73
    %p75 = scmp.ne.s32.totalorder %s67, %s70
    %p76 = scmp.eq.s32.totalorder %s8, 0
    %p77 = por %p75, %p76
    %p78 = scmp.ne.s32.totalorder %s67, %s70
    %p79 = scmp.eq.s32.totalorder %s13, 1
    %p80 = por %p78, %p79
    %p81 = scmp.ne.s32.totalorder %s70, %s71
    %p82 = scmp.eq.s32.totalorder %s13, 0
    %p83 = por %p81, %p82
    %p84 = scmp.ne.s32.totalorder %s70, %s71
    %p85 = scmp.eq.s32.totalorder %s14, 1
    %p86 = por %p84, %p85
    %p88 = scmp.ne.s32.totalorder %s71, %s87
    %p89 = scmp.eq.s32.totalorder %s14, 0
    %p90 = por %p88, %p89
    %s91 = ssub.s32 %s16, %s30
    %s92 = ssub.s32 %s15, %s34
    %s93 = sor.u32 %s91, %s92
    %p94 = scmp.eq.s32.totalorder %s93, 0
    %s96 = sadd.s32 %s95, 1
    %s97 = scalar_select %p94, %s95, %s96
    %p100 = pneg %p94
    %p101 = scmp.eq.s32.totalorder %s8, 1
    %p102 = por %p100, %p101
    %p103 = scmp.ne.s32.totalorder %s95, %s98
    %p104 = scmp.eq.s32.totalorder %s8, 0
    %p105 = por %p103, %p104
    %p106 = scmp.ne.s32.totalorder %s95, %s98
    %p107 = scmp.eq.s32.totalorder %s13, 1
    %p108 = por %p106, %p107
    %p109 = scmp.ne.s32.totalorder %s98, %s99
    %p110 = scmp.eq.s32.totalorder %s13, 0
    %p111 = por %p109, %p110
    %p112 = scmp.ne.s32.totalorder %s98, %s99
    %p113 = scmp.eq.s32.totalorder %s14, 1
    %p114 = por %p112, %p113
    %p116 = scmp.ne.s32.totalorder %s99, %s115
    %p117 = scmp.eq.s32.totalorder %s14, 0
    %p118 = por %p116, %p117
    %p119 = scmp.le.s32.totalorder 1, %s8
    %p120 = scmp.lt.s32.totalorder %s8, 3
    %p121 = pnand %p119, %p120
    %p122 = pneg %p121
    // Predicated region
    $region9: #{_lambda_.4} parent=5 // pred_check
      _
    $region10: #{_lambda_.4} parent=5 // pred_check_branch
      %124 = sbr.rel (%p121) target = $region12
    $region11: #{_lambda_.4} parent=5 // pred_region
      %s125 = ssub.s32 %s8, 1
      // Predicated region
      $region13: #{_lambda_.4} parent=11 // pred_check
        %p126 = pneg %p83
      $region14: #{_lambda_.4} parent=11 // pred_check_branch
        %128 = sbr.rel (%p126) target = $region16
      $region15: #{_lambda_.4} parent=11 // pred_region
        %s129 = smul.u32 16, %s20
        %p130 = scmp.lt.s32.totalorder %s129, 15
        %s131 = scalar_select %p130, %s129, 15
        %p132 = scmp.lt.s32.totalorder %s18, 0
        %s133 = scalar_select %p132, %s18, 0
        %s134 = sadd.s32 %s133, %s131
        %s135 = smul.addr %s134, 4
        %s136 = scalar_lea.vmem %s1, %s135
        %s137 = smul.u32 16, %s20
      $region16: #{_lambda_.4} parent=11 // pred_fallthru
        _
    $region12: #{_lambda_.4} parent=5 // pred_fallthru
      _
    %p138 = scmp.lt.s32.totalorder %s8, 2
    // Predicated region
    $region17: #{_lambda_.4} parent=5 // pred_check
      %p139 = pneg %p138
    $region18: #{_lambda_.4} parent=5 // pred_check_branch
      %141 = sbr.rel (%p139) target = $region20
    $region19: #{_lambda_.4} parent=5 // pred_region
      // Predicated region
      $region21: #{_lambda_.4} parent=19 // pred_check
        %p142 = pneg %p49
      $region22: #{_lambda_.4} parent=19 // pred_check_branch
        %144 = sbr.rel (%p142) target = $region24
      $region23: #{_lambda_.4} parent=19 // pred_region
        %s145 = smul.u32 2, %s16
        %p146 = scmp.lt.s32.totalorder %s145, 3
        %s147 = scalar_select %p146, %s145, 3
        %p148 = scmp.lt.s32.totalorder %s17, 0
        %s149 = scalar_select %p148, %s17, 0
        %s150 = sadd.s32 %s149, %s147
        %s151 = smul.addr %s150, 4
        %s152 = scalar_lea.vmem %s0, %s151
        %s153 = smul.u32 2, %s16
      $region24: #{_lambda_.4} parent=19 // pred_fallthru
        _
    $region20: #{_lambda_.4} parent=5 // pred_fallthru
      _
    %p154 = scmp.le.s32.totalorder 1, %s8
    %p155 = scmp.lt.s32.totalorder %s8, 3
    %p156 = pnand %p154, %p155
    %p157 = pneg %p156
    // Predicated region
    $region25: #{_lambda_.4} parent=5 // pred_check
      _
    $region26: #{_lambda_.4} parent=5 // pred_check_branch
      %159 = sbr.rel (%p156) target = $region28
    $region27: #{_lambda_.4} parent=5 // pred_region
      %s160 = ssub.s32 %s8, 1
      %s161 = smul.u32 2, %s19
      %p162 = scmp.lt.s32.totalorder %s161, 3
      %s163 = scalar_select %p162, %s161, 3
      %p164 = scmp.lt.s32.totalorder %s20, 0
      %s165 = scalar_select %p164, %s20, 0
      %s166 = sadd.s32 %s165, %s163
      %s167 = smul.addr %s166, 4
      %s168 = scalar_lea.vmem %s0, %s167
      %p169 = pneg %p55
      %p170 = pneg %p52
      %s171 = smul.u32 16, %s20
      %p172 = scmp.lt.s32.totalorder %s171, 15
      %s173 = scalar_select %p172, %s171, 15
      %p174 = scmp.lt.s32.totalorder %s18, 0
      %s175 = scalar_select %p174, %s18, 0
      %s176 = sadd.s32 %s175, %s173
      %s177 = smul.addr %s176, 4
      %s178 = scalar_lea.vmem %s1, %s177
      %p179 = pneg %p83
      %p180 = pneg %p80
      %p181 = pneg %p111
      %p182 = pneg %p108
      %s183 = smul.u32 2, %s19
      %p184 = scmp.lt.s32.totalorder %s183, 3
      %s185 = scalar_select %p184, %s183, 3
      %p186 = scmp.lt.s32.totalorder %s18, 0
      %s187 = scalar_select %p186, %s18, 0
      %s188 = sadd.s32 %s187, %s185
      %s189 = smul.addr %s188, 4
      %s190 = scalar_lea.vmem %s2, %s189
      %s191 = smul.u32 2, %s19
      %p192 = scmp.lt.s32.totalorder %s191, 3
      %s193 = scalar_select %p192, %s191, 3
      %p194 = scmp.lt.s32.totalorder %s20, 0
      %s195 = scalar_select %p194, %s20, 0
      %s196 = sadd.s32 %s195, %s193
      %s197 = smul.addr %s196, 4
      %s198 = scalar_lea.vmem %s0, %s197
      %s199 = smul.u32 2, %s19
      %s200 = smul.u32 16, %s20
      %p201 = scmp.lt.s32.totalorder %s200, 15
      %s202 = scalar_select %p201, %s200, 15
      %p203 = scmp.lt.s32.totalorder %s18, 0
      %s204 = scalar_select %p203, %s18, 0
      %s205 = sadd.s32 %s204, %s202
      %s206 = smul.addr %s205, 4
      %s207 = scalar_lea.vmem %s1, %s206
      %s208 = smul.u32 16, %s20
      %s209 = smul.u32 2, %s19
      %p210 = scmp.lt.s32.totalorder %s209, 3
      %s211 = scalar_select %p210, %s209, 3
      %p212 = scmp.lt.s32.totalorder %s18, 0
      %s213 = scalar_select %p212, %s18, 0
      %s214 = sadd.s32 %s213, %s211
      %s215 = smul.addr %s214, 4
      %s216 = scalar_lea.vmem %s2, %s215
      %s217 = smul.u32 2, %s19
      %p218 = scmp.eq.s32.totalorder %s20, 0
      // Predicated region
      $region29: #{_lambda_.4} parent=27 // pred_check
        %p219 = pneg %p218
      $region30: #{_lambda_.4} parent=27 // pred_check_branch
        %221 = sbr.rel (%p219) target = $region32
      $region31: #{_lambda_.4} parent=27 // pred_region
        %222 = vst [vmem:[#allocation2] sm:$0xff] 0.0
        %223 = vst [vmem:[#allocation2 + $0x8] sm:$0xff] 0.0
      $region32: #{_lambda_.4} parent=27 // pred_fallthru
        _
      %v224 = vld [vmem:[#allocation2] sm:$0xff]
      %v225 = vld [vmem:[#allocation2 + $0x8] sm:$0xff]
      %v226 = vld [vmem:[%s198] sm:$0xf]
      %v227 = vld [vmem:[%s198 + $0x4] sm:$0xf]
      %v228 = vld [vmem:[%s207] sm:$0xf]
      %v229 = vld [vmem:[%s207 + $0x4] sm:$0xf]
      %v230 = vld [vmem:[%s207 + $0x8] sm:$0xf]
      %v231 = vld [vmem:[%s207 + $0xc] sm:$0xf]
      %v232 = vld [vmem:[%s207 + $0x10] sm:$0xf]
      %v233 = vld [vmem:[%s207 + $0x14] sm:$0xf]
      %v234 = vld [vmem:[%s207 + $0x18] sm:$0xf]
      %v235 = vld [vmem:[%s207 + $0x1c] sm:$0xf]
      %v236 = vld [vmem:[%s207 + $0x20] sm:$0xf]
      %v237 = vld [vmem:[%s207 + $0x24] sm:$0xf]
      %v238 = vld [vmem:[%s207 + $0x28] sm:$0xf]
      %v239 = vld [vmem:[%s207 + $0x2c] sm:$0xf]
      %v240 = vld [vmem:[%s207 + $0x30] sm:$0xf]
      %v241 = vld [vmem:[%s207 + $0x34] sm:$0xf]
      %v242 = vld [vmem:[%s207 + $0x38] sm:$0xf]
      %v243 = vld [vmem:[%s207 + $0x3c] sm:$0xf]
      %v246 = vunpack.c.l.b16 %v226
      %v247 = vunpack.c.l.b16 %v227
      %v248 = vpack.c.b16 %v247, %v246
      %v266 = vunpack.c.l.b16 %v228
      %v267 = vunpack.c.l.b16 %v229
      %v268 = vunpack.c.l.b16 %v230
      %v269 = vunpack.c.l.b16 %v231
      %v270 = vunpack.c.l.b16 %v232
      %v271 = vunpack.c.l.b16 %v233
      %v272 = vunpack.c.l.b16 %v234
      %v273 = vunpack.c.l.b16 %v235
      %v274 = vunpack.c.l.b16 %v236
      %v275 = vunpack.c.l.b16 %v237
      %v276 = vunpack.c.l.b16 %v238
      %v277 = vunpack.c.l.b16 %v239
      %v278 = vunpack.c.l.b16 %v240
      %v279 = vunpack.c.l.b16 %v241
      %v280 = vunpack.c.l.b16 %v242
      %v281 = vunpack.c.l.b16 %v243
      %v282 = vpack.c.b16 %v267, %v266
      %v283 = vpack.c.b16 %v269, %v268
      %v284 = vpack.c.b16 %v271, %v270
      %v285 = vpack.c.b16 %v273, %v272
      %v286 = vpack.c.b16 %v275, %v274
      %v287 = vpack.c.b16 %v277, %v276
      %v288 = vpack.c.b16 %v279, %v278
      %v289 = vpack.c.b16 %v281, %v280
      %298 = vmatpush.bf16.msra.mxu0 %v289
      %299 = vmatpush.bf16.msra.mxu0 %v288
      %300 = vmatpush.bf16.msra.mxu0 %v287
      %301 = vmatpush.bf16.msra.mxu0 %v286
      %302 = vmatpush.bf16.msra.mxu0 %v285
      %303 = vmatpush.bf16.msra.mxu0 %v284
      %304 = vmatpush.bf16.msra.mxu0 %v283
      %305 = vmatpush.bf16.msra.mxu0 %v282
      %306 = vmatmul.bf16.gmra.mxu0 %v248
      %v307 = vpop.f32.mrf.mxu0
      %v308 = vadd.f32 0.0, %v307
      %v309 = vpop.f32.mrf.mxu0
      %v310 = vadd.f32 0.0, %v309
      %311 = vdwg.mxu0
      %v312 = vadd.f32 %v224, %v308
      %v313 = vadd.f32 %v225, %v310
      %314 = vst [vmem:[#allocation2] sm:$0xff] %v312
      %315 = vst [vmem:[#allocation2 + $0x8] sm:$0xff] %v313
      // Predicated region
      $region33: #{_lambda_.4} parent=27 // pred_check
        %p316 = pneg %p218
      $region34: #{_lambda_.4} parent=27 // pred_check_branch
        %318 = sbr.rel (%p316) target = $region36
      $region35: #{_lambda_.4} parent=27 // pred_region
        %v319 = vld [vmem:[#allocation2] sm:$0xff]
        %v320 = vld [vmem:[#allocation2 + $0x8] sm:$0xff]
        %v321 = vmax.f32 %v319, 0.0
        %v322 = vmax.f32 %v320, 0.0
        %v323 = vpack.c.bf16 %v321, %v321
        %v324 = vpack.c.bf16 %v322, %v322
        %325 = vst [vmem:[%s216] sm:$0xf] %v323
        %326 = vst [vmem:[%s216 + $0x4] sm:$0xf] %v324
      $region36: #{_lambda_.4} parent=27 // pred_fallthru
        _
      %s327 = smul.u32 2, %s19
      %p328 = scmp.lt.s32.totalorder %s327, 3
      %s329 = scalar_select %p328, %s327, 3
      %p330 = scmp.lt.s32.totalorder %s18, 0
      %s331 = scalar_select %p330, %s18, 0
      %s332 = sadd.s32 %s331, %s329
      %s333 = smul.addr %s332, 4
      %s334 = scalar_lea.vmem %s2, %s333
      // Predicated region
      $region37: #{_lambda_.4} parent=27 // pred_check
        %p335 = pneg %p108
      $region38: #{_lambda_.4} parent=27 // pred_check_branch
        %337 = sbr.rel (%p335) target = $region40
      $region39: #{_lambda_.4} parent=27 // pred_region
        %s338 = smul.u32 2, %s19
      $region40: #{_lambda_.4} parent=27 // pred_fallthru
        _
    $region28: #{_lambda_.4} parent=5 // pred_fallthru
      _
    %p339 = scmp.le.s32.totalorder 2, %s8
    // Predicated region
    $region41: #{_lambda_.4} parent=5 // pred_check
      %p340 = pneg %p339
    $region42: #{_lambda_.4} parent=5 // pred_check_branch
      %342 = sbr.rel (%p340) target = $region44
    $region43: #{_lambda_.4} parent=5 // pred_region
      %s343 = ssub.s32 %s8, 2
      // Predicated region
      $region45: #{_lambda_.4} parent=43 // pred_check
        %p344 = pneg %p114
      $region46: #{_lambda_.4} parent=43 // pred_check_branch
        %346 = sbr.rel (%p344) target = $region48
      $region47: #{_lambda_.4} parent=43 // pred_region
        %s347 = smul.u32 2, %s22
        %p348 = scmp.lt.s32.totalorder %s347, 3
        %s349 = scalar_select %p348, %s347, 3
        %p350 = scmp.lt.s32.totalorder %s21, 0
        %s351 = scalar_select %p350, %s21, 0
        %s352 = sadd.s32 %s351, %s349
        %s353 = smul.addr %s352, 4
        %s354 = scalar_lea.vmem %s2, %s353
      $region48: #{_lambda_.4} parent=43 // pred_fallthru
        _
    $region44: #{_lambda_.4} parent=5 // pred_fallthru
      _
  $region6: #{_lambda_.4} parent=0 // loop_footer
    %s12 = sadd.s32 1, %s8
  $region7: #{_lambda_.4} parent=0 // loop_footer_branch
    %7 = sbr.rel target = $region3
  $region8: #{_lambda_.4} parent=0 // loop_exit
    _

// kernel: _lambda_.5
$region0: #{_lambda_.5}
  #allocation0 [shape = 'u32[]', space=smem, size = 0x4, offset = 0x4, fixed_abs, tag = 'smem constant byte address 0x4 - core index']
  #allocation1 [shape = 'u32[72,128]{1,0:T(1,128)}', space=vmem, size = 0x9000, scoped, tag = 'internal scratch']
  #allocation2 [shape = 'f32[2,128]{1,0:T(2,128)}', space=vmem, size = 0x400, scoped, tag = 'scratch operand']
  %s0 = inlined_call_operand.vmem [shape: bf16[2,256], index: 0, kind: input, shape index: {}]
  %s1 = inlined_call_operand.vmem [shape: bf16[256,128], index: 1, kind: input, shape index: {}]
  %s2 = inlined_call_operand.vmem [shape: f32[2,128], index: 2, kind: output, shape index: {}]
  %s3 = sld [smem:[#allocation0]]
  $region26: #{_lambda_.5} parent=0
    _
  %s5 = ssub.s32 1, %s3
  %s6 = scalar_select 0, %s5, %s3
  // Predicated region
  $region2: #{_lambda_.5} parent=0 // pred_check
    _
  $region3: #{_lambda_.5} parent=0 // pred_check_branch
    %8 = sbr.rel (0) target = $region5
  $region4: #{_lambda_.5} parent=0 // pred_region
    _
  $region5: #{_lambda_.5} parent=0 // pred_fallthru
    _
  // Predicated region
  $region6: #{_lambda_.5} parent=0 // pred_check
    _
  $region7: #{_lambda_.5} parent=0 // pred_check_branch
    %10 = sbr.rel (0) target = $region9
  $region8: #{_lambda_.5} parent=0 // pred_region
    _
  $region9: #{_lambda_.5} parent=0 // pred_fallthru
    _
  %p11 = scmp.eq.s32.totalorder 0, 0
  // Predicated region
  $region10: #{_lambda_.5} parent=0 // pred_check
    %p12 = pneg %p11
  $region11: #{_lambda_.5} parent=0 // pred_check_branch
    %14 = sbr.rel (%p12) target = $region13
  $region12: #{_lambda_.5} parent=0 // pred_region
    %15 = vst [vmem:[#allocation2] sm:$0x3] 0.0
  $region13: #{_lambda_.5} parent=0 // pred_fallthru
    _
  %v16 = vld [vmem:[#allocation2] sm:$0x3]
  %v17 = vld [vmem:[%s0] sm:$0x3]
  %v18 = vld [vmem:[%s1] sm:$0xf]
  %v19 = vld [vmem:[%s1 + $0x4] sm:$0xf]
  %v20 = vld [vmem:[%s1 + $0x8] sm:$0xf]
  %v21 = vld [vmem:[%s1 + $0xc] sm:$0xf]
  %v22 = vld [vmem:[%s1 + $0x10] sm:$0xf]
  %v23 = vld [vmem:[%s1 + $0x14] sm:$0xf]
  %v24 = vld [vmem:[%s1 + $0x18] sm:$0xf]
  %v25 = vld [vmem:[%s1 + $0x1c] sm:$0xf]
  %v26 = vld [vmem:[%s1 + $0x20] sm:$0xf]
  %v27 = vld [vmem:[%s1 + $0x24] sm:$0xf]
  %v28 = vld [vmem:[%s1 + $0x28] sm:$0xf]
  %v29 = vld [vmem:[%s1 + $0x2c] sm:$0xf]
  %v30 = vld [vmem:[%s1 + $0x30] sm:$0xf]
  %v31 = vld [vmem:[%s1 + $0x34] sm:$0xf]
  %v32 = vld [vmem:[%s1 + $0x38] sm:$0xf]
  %v33 = vld [vmem:[%s1 + $0x3c] sm:$0xf]
  %v34 = vld [vmem:[%s1 + $0x40] sm:$0xf]
  %v35 = vld [vmem:[%s1 + $0x44] sm:$0xf]
  %v36 = vld [vmem:[%s1 + $0x48] sm:$0xf]
  %v37 = vld [vmem:[%s1 + $0x4c] sm:$0xf]
  %v38 = vld [vmem:[%s1 + $0x50] sm:$0xf]
  %v39 = vld [vmem:[%s1 + $0x54] sm:$0xf]
  %v40 = vld [vmem:[%s1 + $0x58] sm:$0xf]
  %v41 = vld [vmem:[%s1 + $0x5c] sm:$0xf]
  %v42 = vld [vmem:[%s1 + $0x60] sm:$0xf]
  %v43 = vld [vmem:[%s1 + $0x64] sm:$0xf]
  %v44 = vld [vmem:[%s1 + $0x68] sm:$0xf]
  %v45 = vld [vmem:[%s1 + $0x6c] sm:$0xf]
  %v46 = vld [vmem:[%s1 + $0x70] sm:$0xf]
  %v47 = vld [vmem:[%s1 + $0x74] sm:$0xf]
  %v48 = vld [vmem:[%s1 + $0x78] sm:$0xf]
  %v49 = vld [vmem:[%s1 + $0x7c] sm:$0xf]
  %51 = vst [vmem:[#allocation1] ss:$9 sm:$0xff] %v17
  %v52 = vld [vmem:[#allocation1] sm:$0xff]
  %v53 = vld [vmem:[#allocation1 + $0x9] sm:$0xff]
  %v88 = vunpack.c.l.b16 %v18
  %v89 = vunpack.c.l.b16 %v19
  %v90 = vunpack.c.l.b16 %v20
  %v91 = vunpack.c.l.b16 %v21
  %v92 = vunpack.c.l.b16 %v22
  %v93 = vunpack.c.l.b16 %v23
  %v94 = vunpack.c.l.b16 %v24
  %v95 = vunpack.c.l.b16 %v25
  %v96 = vunpack.c.l.b16 %v26
  %v97 = vunpack.c.l.b16 %v27
  %v98 = vunpack.c.l.b16 %v28
  %v99 = vunpack.c.l.b16 %v29
  %v100 = vunpack.c.l.b16 %v30
  %v101 = vunpack.c.l.b16 %v31
  %v102 = vunpack.c.l.b16 %v32
  %v103 = vunpack.c.l.b16 %v33
  %v104 = vunpack.c.l.b16 %v34
  %v105 = vunpack.c.l.b16 %v35
  %v106 = vunpack.c.l.b16 %v36
  %v107 = vunpack.c.l.b16 %v37
  %v108 = vunpack.c.l.b16 %v38
  %v109 = vunpack.c.l.b16 %v39
  %v110 = vunpack.c.l.b16 %v40
  %v111 = vunpack.c.l.b16 %v41
  %v112 = vunpack.c.l.b16 %v42
  %v113 = vunpack.c.l.b16 %v43
  %v114 = vunpack.c.l.b16 %v44
  %v115 = vunpack.c.l.b16 %v45
  %v116 = vunpack.c.l.b16 %v46
  %v117 = vunpack.c.l.b16 %v47
  %v118 = vunpack.c.l.b16 %v48
  %v119 = vunpack.c.l.b16 %v49
  %v120 = vpack.c.b16 %v89, %v88
  %v121 = vpack.c.b16 %v91, %v90
  %v122 = vpack.c.b16 %v93, %v92
  %v123 = vpack.c.b16 %v95, %v94
  %v124 = vpack.c.b16 %v97, %v96
  %v125 = vpack.c.b16 %v99, %v98
  %v126 = vpack.c.b16 %v101, %v100
  %v127 = vpack.c.b16 %v103, %v102
  %v128 = vpack.c.b16 %v105, %v104
  %v129 = vpack.c.b16 %v107, %v106
  %v130 = vpack.c.b16 %v109, %v108
  %v131 = vpack.c.b16 %v111, %v110
  %v132 = vpack.c.b16 %v113, %v112
  %v133 = vpack.c.b16 %v115, %v114
  %v134 = vpack.c.b16 %v117, %v116
  %v135 = vpack.c.b16 %v119, %v118
  %152 = vmatpush.bf16.msra.mxu0 %v127
  %153 = vmatpush.bf16.msra.mxu0 %v126
  %154 = vmatpush.bf16.msra.mxu0 %v125
  %155 = vmatpush.bf16.msra.mxu0 %v124
  %156 = vmatpush.bf16.msra.mxu0 %v123
  %157 = vmatpush.bf16.msra.mxu0 %v122
  %158 = vmatpush.bf16.msra.mxu0 %v121
  %159 = vmatpush.bf16.msra.mxu0 %v120
  %160 = vmatmul.bf16.gmra.mxu0 %v52
  %v161 = vpop.f32.mrf.mxu0
  %v162 = vadd.f32 0.0, %v161
  %v163 = vpop.f32.mrf.mxu0
  %164 = vdwg.mxu0
  %165 = vmatpush.bf16.msra.mxu0 %v135
  %166 = vmatpush.bf16.msra.mxu0 %v134
  %167 = vmatpush.bf16.msra.mxu0 %v133
  %168 = vmatpush.bf16.msra.mxu0 %v132
  %169 = vmatpush.bf16.msra.mxu0 %v131
  %170 = vmatpush.bf16.msra.mxu0 %v130
  %171 = vmatpush.bf16.msra.mxu0 %v129
  %172 = vmatpush.bf16.msra.mxu0 %v128
  %173 = vmatmul.bf16.gmra.mxu0 %v53
  %v174 = vpop.f32.mrf.mxu0
  %v175 = vadd.f32 %v162, %v174
  %v176 = vpop.f32.mrf.mxu0
  %177 = vdwg.mxu0
  %v178 = vadd.f32 %v16, %v175
  %179 = vst [vmem:[#allocation2] sm:$0x3] %v178
  // Predicated region
  $region14: #{_lambda_.5} parent=0 // pred_check
    %p180 = pneg %p11
  $region15: #{_lambda_.5} parent=0 // pred_check_branch
    %182 = sbr.rel (%p180) target = $region17
  $region16: #{_lambda_.5} parent=0 // pred_region
    %v183 = vld [vmem:[#allocation2] sm:$0x3]
    %184 = vst [vmem:[%s2] sm:$0x3] %v183
  $region17: #{_lambda_.5} parent=0 // pred_fallthru
    _
  // Predicated region
  $region18: #{_lambda_.5} parent=0 // pred_check
    _
  $region19: #{_lambda_.5} parent=0 // pred_check_branch
    %186 = sbr.rel (0) target = $region21
  $region20: #{_lambda_.5} parent=0 // pred_region
    _
  $region21: #{_lambda_.5} parent=0 // pred_fallthru
    _
  // Predicated region
  $region22: #{_lambda_.5} parent=0 // pred_check
    _
  $region23: #{_lambda_.5} parent=0 // pred_check_branch
    %188 = sbr.rel (0) target = $region25
  $region24: #{_lambda_.5} parent=0 // pred_region
    _
  $region25: #{_lambda_.5} parent=0 // pred_fallthru
    _

</llo_original>
